<compile_context>
chip_gen: v5e
topology: v5e:2x2
jax: 0.10.0
libtpu: 0.0.40
codegen_flags: <defaults>
</compile_context>

<pallas_src>
import functools

import jax
import jax.numpy as jnp
from jax.experimental import pallas as pl
from jax.experimental.pallas import tpu as pltpu


_F32_TEMPS = 5  # x_f32, t_f32, x*t, x-m, exp(x-m): conservative peak temp count


# --------------------------------------------------------------------------- #
# Kernels
# --------------------------------------------------------------------------- #
def _ls_single_pass_kernel(x_ref, t_ref, out_ref, *, confidence, smoothing,
                           n_rows, tile_n, mask_rows):
    """One full-C row tile per grid step; emits a single partial-sum block."""
    x = x_ref[...].astype(jnp.float32)                     # (tile_n, C)
    t = t_ref[...].astype(jnp.float32)                     # (tile_n, C)
    n_cols = x.shape[-1]

    # Numerically stable logsumexp per row; logprobs = x - lse is never built.
    m = jnp.max(x, axis=-1, keepdims=True)                 # (tile_n, 1)
    s = jnp.sum(jnp.exp(x - m), axis=-1, keepdims=True)    # (tile_n, 1)
    lse = m + jnp.log(s)

    # TODO(synk): if a v7x trace shows VALU saturation, these lane reductions
    # can be offloaded to the idle MXU via jnp.dot(x, ones((C, 1), f32)).
    sum_t = jnp.sum(t, axis=-1, keepdims=True)
    sum_xt = jnp.sum(x * t, axis=-1, keepdims=True)
    sum_x = jnp.sum(x, axis=-1, keepdims=True)

    nll = lse * sum_t - sum_xt                   # = sum_c t_c * (lse - x_c)
    smooth = lse - sum_x * (1.0 / n_cols)        # = mean_c (lse - x_c)
    loss = confidence * nll + smoothing * smooth           # (tile_n, 1)

    if mask_rows:  # static flag: only emitted for the ragged-N case
        rows = pl.program_id(0) * tile_n + jax.lax.broadcasted_iota(
            jnp.int32, loss.shape, 0)
        loss = jnp.where(rows < n_rows, loss, 0.0)

    # Single lane/sublane-dense store per grid step (4 KiB writeback) instead
    # of a masked (tile_n, 1) column store.
    out_ref[...] = jnp.broadcast_to(jnp.sum(loss), out_ref.shape)


def _ls_csplit_kernel(x_ref, t_ref, out_ref,
                      m_sc, s_sc, sumt_sc, sumxt_sc, sumx_sc, *,
                      confidence, smoothing, n_rows, n_cols, tile_n, tile_c,
                      mask_rows, mask_cols):
    """Large-C path: online logsumexp over a trailing 'arbitrary' class axis."""
    k = pl.program_id(1)

    @pl.when(k == 0)
    def _init():
        m_sc[...] = jnp.full_like(m_sc, -jnp.inf)
        s_sc[...] = jnp.zeros_like(s_sc)
        sumt_sc[...] = jnp.zeros_like(sumt_sc)
        sumxt_sc[...] = jnp.zeros_like(sumxt_sc)
        sumx_sc[...] = jnp.zeros_like(sumx_sc)

    x = x_ref[...].astype(jnp.float32)                     # (tile_n, tile_c)
    t = t_ref[...].astype(jnp.float32)

    if mask_cols:  # static flag: only emitted when C % tile_c != 0
        cols = k * tile_c + jax.lax.broadcasted_iota(jnp.int32, x.shape, 1)
        cvalid = cols < n_cols
        x_max = jnp.where(cvalid, x, -jnp.inf)             # neutral for max/exp
        x_sum = jnp.where(cvalid, x, 0.0)                  # neutral for sums
        t = jnp.where(cvalid, t, 0.0)
    else:
        x_max = x
        x_sum = x

    # Streaming (online) logsumexp accumulation over the class axis.
    m_prev = m_sc[...]
    m_new = jnp.maximum(m_prev, jnp.max(x_max, axis=-1, keepdims=True))
    s_sc[...] = (s_sc[...] * jnp.exp(m_prev - m_new)
                 + jnp.sum(jnp.exp(x_max - m_new), axis=-1, keepdims=True))
    m_sc[...] = m_new

    sumt_sc[...] += jnp.sum(t, axis=-1, keepdims=True)
    sumxt_sc[...] += jnp.sum(x_sum * t, axis=-1, keepdims=True)
    sumx_sc[...] += jnp.sum(x_sum, axis=-1, keepdims=True)

    @pl.when(k == pl.num_programs(1) - 1)
    def _finalize():
        lse = m_sc[...] + jnp.log(s_sc[...])
        nll = lse * sumt_sc[...] - sumxt_sc[...]
        smooth = lse - sumx_sc[...] * (1.0 / n_cols)
        loss = confidence * nll + smoothing * smooth       # (tile_n, 1)
        if mask_rows:
            rows = pl.program_id(0) * tile_n + jax.lax.broadcasted_iota(
                jnp.int32, loss.shape, 0)
            loss = jnp.where(rows < n_rows, loss, 0.0)
        out_ref[...] = jnp.broadcast_to(jnp.sum(loss), out_ref.shape)


# --------------------------------------------------------------------------- #
# Planning helpers
# --------------------------------------------------------------------------- #
def _sublane_multiple(*dtypes):
    """Row alignment: 8 rows for f32, 16 for bf16, 32 for int8/fp8 packing."""
    sub = 8
    for dt in dtypes:
        item = jnp.dtype(dt).itemsize
        sub = max(sub, 8 * max(1, 4 // max(1, item)))
    return sub


def _default_vmem_limit_bytes():
    cap = 0
    try:
        cap = int(pltpu.get_tpu_info().vmem_capacity_bytes)
    except Exception:
        cap = 0
    if cap <= 0:
        cap = 64 * 1024 * 1024  # conservative fallback (v7x physical per core)
    # Leave ~1/4 of physical VMEM to the compiler; never request more than
    # 64 MiB (v5e/v6e sweet spot).  On v7x (64 MiB physical) this yields 48 MiB.
    return int(min(cap * 3 // 4, 64 * 1024 * 1024))


def _plan_tiles(N, C, x_item, t_item, sub, vmem_limit_bytes, tile_n, tile_c):
    """Pick (tile_n, tile_c, use_split).  tile_c == C means single-pass rows."""
    # VMEM bytes per (lane-padded) element of one row tile:
    #   2 inputs x 2 pipeline buffers (native dtype) + ~5 f32 cast temporaries.
    c_pad = max(128, -(-C // 128) * 128)
    per_elem = 2 * (x_item + t_item) + 4 * _F32_TEMPS
    budget = int(vmem_limit_bytes * 0.85)
    rows_fit = budget // max(1, c_pad * per_elem)

    if tile_c is not None and tile_c < C:
        use_split = True
    else:
        use_split = (tile_n is None) and (tile_c is None) and (rows_fit < sub)

    if not use_split:
        if tile_n is None:
            if N <= sub:
                tile_n = N
            else:
                tile_n = max(sub, min((rows_fit // sub) * sub,
                                      (N // sub) * sub, 4096))
                # v7x megacore: prefer >= 2 grid steps when there is enough work.
                if -(-N // tile_n) == 1 and N >= 2 * sub:
                    tile_n = max(sub, ((N + 2 * sub - 1) // (2 * sub)) * sub)
        return tile_n, C, False

    # ---- large-C split path ----
    if tile_n is None:
        tile_n = N if N <= sub else min((N // sub) * sub, 32 * sub)
    if tile_c is None:
        cols_fit = budget // max(1, tile_n * per_elem)
        tile_c = max(128, (cols_fit // 128) * 128)
    tile_c = min(tile_c, c_pad)
    if tile_c >= C:
        return tile_n, C, False
    return tile_n, tile_c, True


# --------------------------------------------------------------------------- #
# Public wrapper
# --------------------------------------------------------------------------- #
def label_smoothing_loss(x, target, smoothing=0.1, *, tile_n=None, tile_c=None,
                         vmem_limit_bytes=None):
    """Pallas implementation of LabelSmoothing.forward (training mode)."""
    N, C = x.shape
    assert target.shape == (N, C)
    smoothing = float(smoothing)
    confidence = 1.0 - smoothing

    x_item = jnp.dtype(x.dtype).itemsize
    t_item = jnp.dtype(target.dtype).itemsize
    sub = _sublane_multiple(x.dtype, target.dtype)
    if vmem_limit_bytes is None:
        vmem_limit_bytes = _default_vmem_limit_bytes()

    tile_n, tile_c, use_split = _plan_tiles(
        N, C, x_item, t_item, sub, vmem_limit_bytes, tile_n, tile_c)

    num_row_tiles = -(-N // tile_n)
    mask_rows = (N % tile_n) != 0

    # Per-tile partial sums, broadcast into a fully (8,128)-aligned block so
    # every grid step does one dense vector store and a tiny writeback DMA.
    out_shape = jax.ShapeDtypeStruct((num_row_tiles, 8, 128), jnp.float32)

    cost = pl.CostEstimate(
        flops=8 * N * C,
        transcendentals=N * C + N,                          # exp + per-row log
        bytes_accessed=N * C * (x_item + t_item) + num_row_tiles * 8 * 128 * 4)

    if not use_split:
        kernel = functools.partial(
            _ls_single_pass_kernel, confidence=confidence, smoothing=smoothing,
            n_rows=N, tile_n=tile_n, mask_rows=mask_rows)
        partials = pl.pallas_call(
            kernel,
            out_shape=out_shape,
            grid_spec=pltpu.PrefetchScalarGridSpec(
                num_scalar_prefetch=0,
                grid=(num_row_tiles,),
                in_specs=[pl.BlockSpec((tile_n, C), lambda i: (i, 0)),
                          pl.BlockSpec((tile_n, C), lambda i: (i, 0))],
                out_specs=pl.BlockSpec((1, 8, 128), lambda i: (i, 0, 0))),
            compiler_params=pltpu.CompilerParams(
                dimension_semantics=("parallel",),
                vmem_limit_bytes=int(vmem_limit_bytes)),
            cost_estimate=cost,
        )(x, target)
    else:
        num_c_tiles = -(-C // tile_c)
        mask_cols = (C % tile_c) != 0
        kernel = functools.partial(
            _ls_csplit_kernel, confidence=confidence, smoothing=smoothing,
            n_rows=N, n_cols=C, tile_n=tile_n, tile_c=tile_c,
            mask_rows=mask_rows, mask_cols=mask_cols)
        partials = pl.pallas_call(
            kernel,
            out_shape=out_shape,
            grid_spec=pltpu.PrefetchScalarGridSpec(
                num_scalar_prefetch=0,
                grid=(num_row_tiles, num_c_tiles),
                in_specs=[pl.BlockSpec((tile_n, tile_c), lambda i, k: (i, k)),
                          pl.BlockSpec((tile_n, tile_c), lambda i, k: (i, k))],
                out_specs=pl.BlockSpec((1, 8, 128), lambda i, k: (i, 0, 0)),
                scratch_shapes=[pltpu.VMEM((tile_n, 1), jnp.float32)] * 5),
            compiler_params=pltpu.CompilerParams(
                dimension_semantics=("parallel", "arbitrary"),
                vmem_limit_bytes=int(vmem_limit_bytes)),
            cost_estimate=cost,
        )(x, target)

    # Tiny final reduction over num_row_tiles partial sums in plain JAX.
    return jnp.sum(partials[:, 0, 0]) / N


# --------------------------------------------------------------------------- #
# Reference + demo
# --------------------------------------------------------------------------- #
def _reference_loss(x, target, smoothing=0.1):
    confidence = 1.0 - smoothing
    xf = x.astype(jnp.float32)
    tf = target.astype(jnp.float32)
    logprobs = jax.nn.log_softmax(xf, axis=-1)
    nll_loss = jnp.sum(-logprobs * tf, axis=-1)
    smooth_loss = jnp.mean(-logprobs, axis=-1)
    return jnp.mean(confidence * nll_loss + smoothing * smooth_loss)


if __name__ == "__main__":
    key = jax.random.PRNGKey(0)
    k1, k2, k3, k4, k5, k6 = jax.random.split(key, 6)

    # Case 1: small f32, one-hot targets, single grid step.
    N1, C1 = 8, 32
    x1 = jax.random.normal(k1, (N1, C1), dtype=jnp.float32)
    t1 = jax.nn.one_hot(jax.random.randint(k2, (N1,), 0, C1), C1,
                        dtype=jnp.float32)
    got1 = jax.block_until_ready(label_smoothing_loss(x1, t1, smoothing=0.1))
    ref1 = jax.block_until_ready(_reference_loss(x1, t1, smoothing=0.1))
    assert jnp.allclose(got1, ref1, atol=1e-4, rtol=1e-4), (got1, ref1)

    # Case 2: bf16 inputs, ragged N (exercises cdiv grid + in-kernel row mask,
    # bf16 sublane packing -> tile_n multiple of 16).
    N2, C2 = 40, 128
    x2 = jax.random.normal(k3, (N2, C2), dtype=jnp.bfloat16)
    t2 = jax.nn.one_hot(jax.random.randint(k4, (N2,), 0, C2), C2,
                        dtype=jnp.bfloat16)
    got2 = jax.block_until_ready(label_smoothing_loss(x2, t2, smoothing=0.1))
    ref2 = jax.block_until_ready(_reference_loss(x2, t2, smoothing=0.1))
    assert jnp.allclose(got2, ref2, atol=1e-4, rtol=1e-4), (got2, ref2)

    # Case 3: soft targets + forced class-axis split (online logsumexp path
    # with column masking, grid = (row_tiles, c_tiles) and 'arbitrary' C axis).
    N3, C3 = 24, 200
    x3 = jax.random.normal(k5, (N3, C3), dtype=jnp.float32)
    t3 = jax.nn.softmax(jax.random.normal(k6, (N3, C3), dtype=jnp.float32),
                        axis=-1)
    got3 = jax.block_until_ready(
        label_smoothing_loss(x3, t3, smoothing=0.1, tile_c=128))
    ref3 = jax.block_until_ready(_reference_loss(x3, t3, smoothing=0.1))
    assert jnp.allclose(got3, ref3, atol=1e-4, rtol=1e-4), (got3, ref3)

    print("KERNEL_OK")
</pallas_src>

<mosaic_0001>
module attributes {stable_mosaic.version = 11 : i64} {
  func.func @_ls_single_pass_kernel(%arg0: i32, %arg1: memref<8x32xf32, #tpu.memory_space<vmem>>, %arg2: memref<8x32xf32, #tpu.memory_space<vmem>>, %arg3: memref<1x8x128xf32, #tpu.memory_space<vmem>>) attributes {dimension_semantics = [#tpu.dimension_semantics<parallel>], iteration_bounds = array<i64: 1>, scalar_prefetch = 0 : i64, scratch_operands = 0 : i64, tpu.core_type = #tpu.core_type<tc>, window_params = [{transform_indices = @transform_0, window_bounds = array<i64: 8, 32>}, {transform_indices = @transform_1, window_bounds = array<i64: 8, 32>}, {transform_indices = @transform_2, window_bounds = array<i64: 1, 8, 128>}]} {
    %c0 = arith.constant 0 : index
    %c0_0 = arith.constant 0 : index
    %0 = vector.load %arg1[%c0, %c0_0] : memref<8x32xf32, #tpu.memory_space<vmem>>, vector<8x32xf32>
    %c0_1 = arith.constant 0 : index
    %c0_2 = arith.constant 0 : index
    %1 = vector.load %arg2[%c0_1, %c0_2] : memref<8x32xf32, #tpu.memory_space<vmem>>, vector<8x32xf32>
    %cst = arith.constant dense<0xFF800000> : vector<8xf32>
    %2 = vector.multi_reduction <maximumf>, %0, %cst [1] : vector<8x32xf32> to vector<8xf32>
    %3 = vector.shape_cast %2 : vector<8xf32> to vector<8x1xf32>
    %4 = vector.broadcast %3 : vector<8x1xf32> to vector<8x32xf32>
    %5 = arith.subf %0, %4 : vector<8x32xf32>
    %6 = math.exp %5 : vector<8x32xf32>
    %cst_3 = arith.constant dense<0.000000e+00> : vector<8xf32>
    %7 = vector.multi_reduction <add>, %6, %cst_3 [1] : vector<8x32xf32> to vector<8xf32>
    %8 = vector.shape_cast %7 : vector<8xf32> to vector<8x1xf32>
    %9 = math.log %8 : vector<8x1xf32>
    %10 = arith.addf %3, %9 : vector<8x1xf32>
    %cst_4 = arith.constant dense<0.000000e+00> : vector<8xf32>
    %11 = vector.multi_reduction <add>, %1, %cst_4 [1] : vector<8x32xf32> to vector<8xf32>
    %12 = vector.shape_cast %11 : vector<8xf32> to vector<8x1xf32>
    %13 = arith.mulf %0, %1 : vector<8x32xf32>
    %cst_5 = arith.constant dense<0.000000e+00> : vector<8xf32>
    %14 = vector.multi_reduction <add>, %13, %cst_5 [1] : vector<8x32xf32> to vector<8xf32>
    %15 = vector.shape_cast %14 : vector<8xf32> to vector<8x1xf32>
    %cst_6 = arith.constant dense<0.000000e+00> : vector<8xf32>
    %16 = vector.multi_reduction <add>, %0, %cst_6 [1] : vector<8x32xf32> to vector<8xf32>
    %17 = vector.shape_cast %16 : vector<8xf32> to vector<8x1xf32>
    %18 = arith.mulf %10, %12 : vector<8x1xf32>
    %19 = arith.subf %18, %15 : vector<8x1xf32>
    %cst_7 = arith.constant 3.125000e-02 : f32
    %20 = vector.broadcast %cst_7 : f32 to vector<8x1xf32>
    %21 = arith.mulf %17, %20 : vector<8x1xf32>
    %22 = arith.subf %10, %21 : vector<8x1xf32>
    %cst_8 = arith.constant 0.899999976 : f32
    %23 = vector.broadcast %cst_8 : f32 to vector<8x1xf32>
    %24 = arith.mulf %23, %19 : vector<8x1xf32>
    %cst_9 = arith.constant 1.000000e-01 : f32
    %25 = vector.broadcast %cst_9 : f32 to vector<8x1xf32>
    %26 = arith.mulf %25, %22 : vector<8x1xf32>
    %27 = arith.addf %24, %26 : vector<8x1xf32>
    %28 = vector.shape_cast %27 : vector<8x1xf32> to vector<1x8x1xf32>
    %cst_10 = arith.constant dense<0.000000e+00> : vector<1xf32>
    %29 = vector.multi_reduction <add>, %28, %cst_10 [1, 2] : vector<1x8x1xf32> to vector<1xf32>
    %30 = vector.shape_cast %29 : vector<1xf32> to vector<1x1x1xf32>
    %31 = vector.extract %30[0, 0, 0] : f32 from vector<1x1x1xf32>
    %32 = vector.broadcast %31 : f32 to vector<1x8x128xf32>
    %c0_11 = arith.constant 0 : index
    %c0_12 = arith.constant 0 : index
    %c0_13 = arith.constant 0 : index
    %33 = vector.load %arg3[%c0_11, %c0_12, %c0_13] : memref<1x8x128xf32, #tpu.memory_space<vmem>>, vector<1x8x128xf32>
    tpu.vector_store %arg3[%c0_11, %c0_12, %c0_13], %32 {strides = array<i32>} : memref<1x8x128xf32, #tpu.memory_space<vmem>>, vector<1x8x128xf32>,
    return
  }
  func.func @transform_0(%arg0: i32) -> (i32, i32) {
    %c0_i32 = arith.constant 0 : i32
    %c0_i32_0 = arith.constant 0 : i32
    return %arg0, %c0_i32 : i32, i32
  }
  func.func @transform_1(%arg0: i32) -> (i32, i32) {
    %c0_i32 = arith.constant 0 : i32
    %c0_i32_0 = arith.constant 0 : i32
    return %arg0, %c0_i32 : i32, i32
  }
  func.func @transform_2(%arg0: i32) -> (i32, i32, i32) {
    %c0_i32 = arith.constant 0 : i32
    %c0_i32_0 = arith.constant 0 : i32
    %c0_i32_1 = arith.constant 0 : i32
    return %arg0, %c0_i32, %c0_i32_0 : i32, i32, i32
  }
}

</mosaic_0001>

<llo_original>
// kernel: tpu_custom_call.1
$region0: #{tpu_custom_call.1}
  #allocation0 [shape = 'u32[]', space=smem, size = 0x4, offset = 0x4, fixed_abs, tag = 'smem constant byte address 0x4 - core index']
  #allocation1 [shape = 'u32[72,128]{1,0:T(1,128)}', space=vmem, size = 0x9000, scoped, tag = 'internal scratch']
  %s0 = inlined_call_operand.hbm [shape: f32[8,32], index: 0, kind: input, shape index: {}]
  %s1 = inlined_call_operand.hbm [shape: f32[8,32], index: 1, kind: input, shape index: {}]
  %s2 = inlined_call_operand.hbm [shape: f32[1,8,128], index: 2, kind: output, shape index: {}]
  %s3 = sld [smem:[#allocation0]]
  $region26: #{tpu_custom_call.1} parent=0
    _
  %s5 = ssub.s32 1, %s3
  %s6 = scalar_select 0, %s5, %s3
  $region1: #{tpu_custom_call.1} parent=0
    #allocation2 [shape = 'u8[4096]{0}', space=vmem, size = 0x1000, scoped, tag = 'input window, operand 0, single buffered']
    #allocation3 [shape = 's32[1]{0}', space=sflag, size = 0x4, scoped, tag = 'scoped memory for tpu_custom_call.1']
    #allocation4 [shape = 's32[1]{0}', space=sflag, size = 0x4, scoped, tag = 'scoped memory for tpu_custom_call.1']
    #allocation5 [shape = 'u8[4096]{0}', space=vmem, size = 0x1000, scoped, tag = 'input window, operand 1, single buffered']
    #allocation6 [shape = 's32[1]{0}', space=sflag, size = 0x4, scoped, tag = 'scoped memory for tpu_custom_call.1']
    #allocation7 [shape = 'u8[4096]{0}', space=vmem, size = 0x1000, scoped, tag = 'output window, operand 0, single buffered']
    %7 = vsyncpa [#allocation3], 0
    %8 = vsyncpa [#allocation6], 0
    %9 = vsyncpa [#allocation4], 0
    // Predicated region
    $region2: #{tpu_custom_call.1} parent=1 // pred_check
      _
    $region3: #{tpu_custom_call.1} parent=1 // pred_check_branch
      %11 = sbr.rel (0) target = $region5
    $region4: #{tpu_custom_call.1} parent=1 // pred_region
      %13 = vsyncadd [#allocation3], 0
      %s15 = sshll.u32 %s0, 4
      %s16 = int_to_ptr.hbm [resolvable:$true] %s15
      %s17 = sshll.u32 [#allocation2], 4
      %s18 = int_to_ptr.vmem [resolvable:$true] %s17
      %20 = dma.hbm_to_vmem [thread:$0]  %s16, 128, %s18, [#allocation3]
    $region5: #{tpu_custom_call.1} parent=1 // pred_fallthru
      _
    // Predicated region
    $region6: #{tpu_custom_call.1} parent=1 // pred_check
      _
    $region7: #{tpu_custom_call.1} parent=1 // pred_check_branch
      %22 = sbr.rel (0) target = $region9
    $region8: #{tpu_custom_call.1} parent=1 // pred_region
      %24 = vsyncadd [#allocation6], 0
      %s26 = sshll.u32 %s1, 4
      %s27 = int_to_ptr.hbm [resolvable:$true] %s26
      %s28 = sshll.u32 [#allocation5], 4
      %s29 = int_to_ptr.vmem [resolvable:$true] %s28
      %31 = dma.hbm_to_vmem [thread:$0]  %s27, 128, %s29, [#allocation6]
    $region9: #{tpu_custom_call.1} parent=1 // pred_fallthru
      _
    // Predicated region
    $region10: #{tpu_custom_call.1} parent=1 // pred_check
      _
    $region11: #{tpu_custom_call.1} parent=1 // pred_check_branch
      %33 = sbr.rel (0) target = $region13
    $region12: #{tpu_custom_call.1} parent=1 // pred_region
      %35 = dma.done [#allocation3], 128
    $region13: #{tpu_custom_call.1} parent=1 // pred_fallthru
      _
    // Predicated region
    $region14: #{tpu_custom_call.1} parent=1 // pred_check
      _
    $region15: #{tpu_custom_call.1} parent=1 // pred_check_branch
      %37 = sbr.rel (0) target = $region17
    $region16: #{tpu_custom_call.1} parent=1 // pred_region
      %39 = dma.done [#allocation6], 128
    $region17: #{tpu_custom_call.1} parent=1 // pred_fallthru
      _
    %v40 = vld [vmem:[#allocation2] sm:$0xff]
    %v41 = vld [vmem:[#allocation5] sm:$0xff]
    %vm42 = vcmask 261120
    %v43 = vsel %vm42, %v40, -inf
    %44 = vmax.xlane.f32.xlu0 %v43
    %v45 = vpop.xlane.xlu0 %44
    %v46 = vsub.f32 %v40, %v45
    %v47 = vmul.f32 %v46, 1.442695
    %v48 = vpow.pop %v47
    %v49 = vsel %vm42, %v48, 0.0
    %50 = vadd.xlane.f32.xlu0 %v49
    %v51 = vpop.xlane.xlu0 %50
    %v52 = vlog2.pop %v51
    %v53 = vmul.f32 %v52, 0.6931472
    %v54 = vadd.f32 %v45, %v53
    %v55 = vsel %vm42, %v41, 0.0
    %56 = vadd.xlane.f32.xlu0 %v55
    %v57 = vpop.xlane.xlu0 %56
    %v58 = vmul.f32 %v40, %v41
    %v59 = vsel %vm42, %v58, 0.0
    %60 = vadd.xlane.f32.xlu0 %v59
    %v61 = vpop.xlane.xlu0 %60
    %v62 = vsel %vm42, %v40, 0.0
    %63 = vadd.xlane.f32.xlu0 %v62
    %v64 = vpop.xlane.xlu0 %63
    %v65 = vmul.f32 %v54, %v57
    %v66 = vsub.f32 %v65, %v61
    %v67 = vmul.f32 %v64, 0.03125
    %v68 = vsub.f32 %v54, %v67
    %v69 = vmul.f32 %v66, 0.9
    %v70 = vmul.f32 %v68, 0.1
    %v71 = vadd.f32 %v69, %v70
    %vm72 = vcmask 7168
    %v73 = vsel %vm72, %v71, 0.0
    %74 = vadd.xlane.f32.xlu0 %v73
    %v75 = vpop.xlane.xlu0 %74
    %v76 = vrot.slane %v75, 4
    %v77 = vadd.f32 %v75, %v76
    %v78 = vrot.slane %v77, 2
    %v79 = vadd.f32 %v77, %v78
    %v80 = vrot.slane %v79, 1
    %v81 = vadd.f32 %v79, %v80
    %s82 = vtos %v81
    %v83 = vstv %s82
    %84 = vst [vmem:[#allocation7] sm:$0xff] %v83
    // Predicated region
    $region18: #{tpu_custom_call.1} parent=1 // pred_check
      _
    $region19: #{tpu_custom_call.1} parent=1 // pred_check_branch
      %86 = sbr.rel (0) target = $region21
    $region20: #{tpu_custom_call.1} parent=1 // pred_region
      %88 = vsyncadd [#allocation4], 0
      %s90 = sshll.u32 [#allocation7], 4
      %s91 = int_to_ptr.vmem [resolvable:$true] %s90
      %s92 = sshll.u32 %s2, 4
      %s93 = int_to_ptr.hbm [resolvable:$true] %s92
      %95 = dma.vmem_to_hbm [thread:$0]  %s91, 128, %s93, [#allocation4]
    $region21: #{tpu_custom_call.1} parent=1 // pred_fallthru
      _
    // Predicated region
    $region22: #{tpu_custom_call.1} parent=1 // pred_check
      _
    $region23: #{tpu_custom_call.1} parent=1 // pred_check_branch
      %97 = sbr.rel (0) target = $region25
    $region24: #{tpu_custom_call.1} parent=1 // pred_region
      %99 = dma.done [#allocation4], 128
    $region25: #{tpu_custom_call.1} parent=1 // pred_fallthru
      _
    %100 = vsyncpa [#allocation3], 1
    %101 = vsyncpa [#allocation6], 1
    %102 = vsyncpa [#allocation4], 1

</llo_original>
